<compile_context>
chip_gen: v7x
topology: tpu7x:2x2x1
jax: 0.10.0
libtpu: 0.0.40
codegen_flags: <defaults>
</compile_context>

<pallas_src>
import functools

import jax
import jax.numpy as jnp
from jax.experimental import pallas as pl
from jax.experimental.pallas import tpu as pltpu

_LANE = 128
_SUBLANE = 8


def _round_up(x, m):
    return ((x + m - 1) // m) * m


def _chip_params():
    """Generation-aware VMEM budgets (best effort; safe defaults otherwise)."""
    kind = ""
    try:
        kind = jax.devices()[0].device_kind.lower()
    except Exception:  # pragma: no cover - non-TPU / detection failure
        pass
    if "v7" in kind:
        # 64 MiB physical VMEM, 32 MiB default scoped; 2 TensorCores.
        return {"slab_budget": 4 << 20, "vmem_limit": None, "two_cores": True}
    if ("v5" in kind) or ("v6" in kind) or ("trillium" in kind):
        # 128 MiB physical VMEM; raise scoped limit, bigger slabs.
        return {"slab_budget": 8 << 20, "vmem_limit": 64 << 20,
                "two_cores": False}
    return {"slab_budget": 4 << 20, "vmem_limit": None, "two_cores": False}


def _choose_tiling(n, c, chip):
    """Row-tile (multiple of 128 lanes) and padded batch size."""
    n128 = _round_up(max(n, 1), _LANE)
    # pairwise phase: the (tile, n_pad) f32 K slab (a few live copies).
    tile_n = max(_LANE, (chip["slab_budget"] // (4 * n128)) // _LANE * _LANE)
    # stats phase: double-buffered (tile, C) f32 logits block, ~8 MiB budget.
    tile_c = max(_LANE, ((8 << 20) // (8 * max(c, 1))) // _LANE * _LANE)
    tile = max(_LANE, min(tile_n, tile_c, 1024, n128))
    n_pad = _round_up(n, tile)
    # v7x megacore: make sure the "parallel" pairwise axis has >= 2 blocks.
    if chip["two_cores"] and n_pad // tile < 2 and tile >= 2 * _LANE:
        tile = max(_LANE, (n_pad // 2) // _LANE * _LANE)
        n_pad = _round_up(n, tile)
    return tile, n_pad


def _stats_kernel(logits_ref, targets_ref, packed_ref, *, n_valid, tile):
    """O(N*C) phase: per-sample stats for one row tile, packed lane-dense.

    Output columns: [a=exp(p/0.4), b=exp(-p/0.4), w_c, w_i, nll, correct, 0, 0]
    """
    logits = logits_ref[...].astype(jnp.float32)      # (tile, C)
    tgt = targets_ref[...]                            # (tile, 1) int32
    T, C = logits.shape

    col = jax.lax.broadcasted_iota(jnp.int32, (T, C), 1)
    row = jax.lax.broadcasted_iota(jnp.int32, (T, 1), 0)
    # rows past the true batch size (padding) contribute nothing
    valid = ((pl.program_id(0) * tile + row) < n_valid).astype(jnp.float32)

    # softmax statistics
    row_max = jnp.max(logits, axis=1, keepdims=True)                 # (T, 1)
    exps = jnp.exp(logits - row_max)
    lse = row_max + jnp.log(jnp.sum(exps, axis=1, keepdims=True))    # (T, 1)

    # cross entropy (sum of per-sample NLL; mean taken in the wrapper)
    onehot = (col == tgt).astype(jnp.float32)
    tgt_logit = jnp.sum(logits * onehot, axis=1, keepdims=True)
    nll = valid * (lse - tgt_logit)

    # predicted label = first index attaining the row max (torch tie rule)
    is_max = logits == row_max
    pred = jnp.min(jnp.where(is_max, col, C), axis=1, keepdims=True)
    correct = valid * (pred == tgt).astype(jnp.float32)

    # max softmax prob, MMCE sampling weights and Laplacian factors.
    # p in (0,1] so a,b are bounded by exp(2.5) -- no overflow, and only O(N)
    # transcendentals total (the O(N^2) kernel is pure VPU work).
    p = jnp.exp(row_max - lse)                                       # (T, 1)
    wc = correct * (1.0 - p)
    wi = (valid - correct) * p
    a = jnp.exp(p * 2.5)       # exp(+p/0.4)
    b = jnp.exp(p * -2.5)      # exp(-p/0.4)

    lane = jax.lax.broadcasted_iota(jnp.int32, (T, 8), 1)
    packed_ref[...] = jnp.where(
        lane == 0, a,
        jnp.where(lane == 1, b,
                  jnp.where(lane == 2, wc,
                            jnp.where(lane == 3, wi,
                                      jnp.where(lane == 4, nll,
                                                jnp.where(lane == 5, correct,
                                                          0.0))))))


def _pairwise_kernel(cols_ref, rows_ref, out_ref):
    """O(N^2) phase: fused cc/ii/ci partials for one row block (VPU only)."""
    cols = cols_ref[...]          # (tile, 8)  -- this block's samples
    a_i = cols[:, 0:1]            # (tile, 1)
    b_i = cols[:, 1:2]
    wc_i = cols[:, 2:3]
    wi_i = cols[:, 3:4]

    rows = rows_ref[...]          # (8, n_pad) -- all samples, lane-dense
    a_j = rows[0:1, :]            # (1, n_pad)
    b_j = rows[1:2, :]
    wc_j = rows[2:3, :]
    wi_j = rows[3:4, :]

    # Laplacian kernel slab via the exp factorization:
    #   exp(-|p_i-p_j|/0.4) = min(exp((p_i-p_j)/0.4), exp((p_j-p_i)/0.4))
    #                       = min(a_i*b_j, b_i*a_j)
    # Padded columns/rows carry zero weight, so they contribute nothing.
    K = jnp.minimum(a_i * b_j, b_i * a_j)                  # (tile, n_pad)

    # Row reductions replace the three K*W_col*W_row products of the naive
    # formulation: cc = w_c.(K w_c), ii = w_i.(K w_i), ci = w_c.(K w_i)
    ru = jnp.sum(K * wc_j, axis=1, keepdims=True)          # (tile, 1)
    rv = jnp.sum(K * wi_j, axis=1, keepdims=True)          # (tile, 1)

    cc = jnp.sum(wc_i * ru)
    ii = jnp.sum(wi_i * rv)
    ci = jnp.sum(wc_i * rv)

    lanes = jax.lax.broadcasted_iota(jnp.int32, (_SUBLANE, _LANE), 1)
    rows8 = jax.lax.broadcasted_iota(jnp.int32, (_SUBLANE, _LANE), 0)
    out_ref[...] = jnp.where(
        (rows8 == 0) & (lanes == 0), cc,
        jnp.where((rows8 == 0) & (lanes == 1), ii,
                  jnp.where((rows8 == 0) & (lanes == 2), ci, 0.0)))


def mmce_loss(logits, targets, beta=2.0):
    """MMCE.forward(logits, targets): CE(logits, targets) + beta * MMCE_w."""
    N, C = logits.shape
    chip = _chip_params()
    tile, n_pad = _choose_tiling(N, C, chip)
    grid = n_pad // tile

    cparams = pltpu.CompilerParams(
        dimension_semantics=("parallel",),
        vmem_limit_bytes=chip["vmem_limit"])

    # Pad the batch; padded rows are masked inside kernel A (zero weights),
    # so they contribute nothing to either term.
    logits_p = jnp.pad(logits, ((0, n_pad - N), (0, 0)))
    tgt_p = jnp.pad(targets.astype(jnp.int32), (0, n_pad - N)).reshape(n_pad, 1)

    # --- Kernel A: per-sample stats, packed into one (n_pad, 8) array -------
    packed_cols = pl.pallas_call(
        functools.partial(_stats_kernel, n_valid=N, tile=tile),
        out_shape=jax.ShapeDtypeStruct((n_pad, 8), jnp.float32),
        grid=(grid,),
        in_specs=[
            pl.BlockSpec((tile, C), lambda b: (b, 0)),
            pl.BlockSpec((tile, 1), lambda b: (b, 0)),
        ],
        out_specs=pl.BlockSpec((tile, 8), lambda b: (b, 0)),
        compiler_params=cparams,
    )(logits_p, tgt_p)

    # One tiny O(N) XLA transpose -> lane-dense (8, n_pad) row view for the
    # broadcast ("j") side of the pairwise kernel.
    packed_rows = packed_cols.T

    # --- Kernel B: pairwise cc/ii/ci partials per row block -----------------
    parts = pl.pallas_call(
        _pairwise_kernel,
        out_shape=jax.ShapeDtypeStruct((grid * _SUBLANE, _LANE), jnp.float32),
        grid=(grid,),
        in_specs=[
            pl.BlockSpec((tile, 8), lambda b: (b, 0)),
            pl.BlockSpec((8, n_pad), lambda b: (0, 0)),
        ],
        out_specs=pl.BlockSpec((_SUBLANE, _LANE), lambda b: (b, 0)),
        compiler_params=cparams,
    )(packed_cols, packed_rows)

    # --- O(N)/O(grid) glue + scalar math in plain JAX -----------------------
    ce_sum = jnp.sum(packed_cols[:, 4])
    m = jnp.sum(packed_cols[:, 5])
    parts_sum = jnp.sum(parts.reshape(grid, _SUBLANE * _LANE), axis=0)
    cc, ii, ci = parts_sum[0], parts_sum[1], parts_sum[2]

    cls_loss = ce_sum / N
    n_inc = jnp.float32(N) - m

    m_safe = jnp.maximum(m, 1.0)
    n_safe = jnp.maximum(n_inc, 1.0)
    mm = m_safe * m_safe
    nn2 = n_safe * n_safe
    mn = m_safe * n_safe

    # reference divides once by k*k (torch.mean over the pair tensor) and
    # again by (m*m + 1e-5); reproduce that double normalization exactly.
    mmd = (cc / mm / (mm + 1e-5)
           + ii / nn2 / (nn2 + 1e-5)
           - 2.0 * ci / mn / (mn + 1e-5))

    cond = (m > 0.0) & (n_inc > 0.0)
    # clamp before sqrt (mmd can go slightly negative numerically) and gate
    # with where so the cond==0 edge case can never produce 0 * NaN.
    calib = jnp.where(cond, jnp.sqrt(jnp.maximum(mmd, 0.0) + 1e-10), 0.0)
    return cls_loss + beta * calib


def _reference(logits, targets, beta):
    """Plain-JAX reference of the same forward semantics (for the smoke test)."""
    logits = logits.astype(jnp.float32)
    N, _ = logits.shape
    lse = jax.scipy.special.logsumexp(logits, axis=1)
    tgt_logit = jnp.take_along_axis(logits, targets[:, None], axis=1)[:, 0]
    cls_loss = jnp.mean(lse - tgt_logit)

    p = jnp.max(jax.nn.softmax(logits, axis=1), axis=1)
    correct = (jnp.argmax(logits, axis=1) == targets).astype(jnp.float32)
    m = jnp.sum(correct)
    n = N - m
    wc = correct * (1.0 - p)
    wi = (1.0 - correct) * p
    K = jnp.exp(-jnp.abs(p[:, None] - p[None, :]) / 0.4)
    cc = wc @ (K @ wc)
    ii = wi @ (K @ wi)
    ci = wc @ (K @ wi)
    m_s, n_s = jnp.maximum(m, 1.0), jnp.maximum(n, 1.0)
    mm, nn2, mn = m_s * m_s, n_s * n_s, m_s * n_s
    mmd = (cc / mm / (mm + 1e-5) + ii / nn2 / (nn2 + 1e-5)
           - 2.0 * ci / mn / (mn + 1e-5))
    cond = (m > 0.0) & (n > 0.0)
    calib = jnp.where(cond, jnp.sqrt(jnp.maximum(mmd, 0.0) + 1e-10), 0.0)
    return cls_loss + beta * calib


if __name__ == "__main__":
    key = jax.random.PRNGKey(0)
    k_logits, k_targets = jax.random.split(key)

    N, C = 128, 10  # batch of 128 samples, 10 classes (CIFAR-10-like)
    logits = jax.random.normal(k_logits, (N, C), dtype=jnp.float32) * 2.0
    targets = jax.random.randint(k_targets, (N,), 0, C, dtype=jnp.int32)

    loss = mmce_loss(logits, targets, beta=2.0)
    loss = jax.block_until_ready(loss)
    assert jnp.isfinite(loss), "loss is not finite"

    ref = jax.block_until_ready(_reference(logits, targets, 2.0))
    assert jnp.allclose(loss, ref, rtol=2e-3, atol=2e-3), (loss, ref)
    print("KERNEL_OK")
</pallas_src>

<mosaic_0001>
module attributes {stable_mosaic.version = 11 : i64} {
  func.func @_stats_kernel(%arg0: i32, %arg1: memref<128x10xf32, #tpu.memory_space<vmem>>, %arg2: memref<128x1xi32, #tpu.memory_space<vmem>>, %arg3: memref<128x8xf32, #tpu.memory_space<vmem>>) attributes {dimension_semantics = [#tpu.dimension_semantics<parallel>], iteration_bounds = array<i64: 1>, scalar_prefetch = 0 : i64, scratch_operands = 0 : i64, tpu.core_type = #tpu.core_type<tc>, window_params = [{transform_indices = @transform_0, window_bounds = array<i64: 128, 10>}, {transform_indices = @transform_1, window_bounds = array<i64: 128, 1>}, {transform_indices = @transform_2, window_bounds = array<i64: 128, 8>}]} {
    %c0 = arith.constant 0 : index
    %c0_0 = arith.constant 0 : index
    %0 = vector.load %arg1[%c0, %c0_0] : memref<128x10xf32, #tpu.memory_space<vmem>>, vector<128x10xf32>
    %c0_1 = arith.constant 0 : index
    %c0_2 = arith.constant 0 : index
    %1 = vector.load %arg2[%c0_1, %c0_2] : memref<128x1xi32, #tpu.memory_space<vmem>>, vector<128x1xi32>
    %2 = tpu.iota {dimensions = array<i32: 1>} : vector<128x10xi32>
    %3 = tpu.iota {dimensions = array<i32: 0>} : vector<128x1xi32>
    %c128_i32 = arith.constant 128 : i32
    %4 = arith.muli %arg0, %c128_i32 : i32
    %5 = vector.broadcast %4 : i32 to vector<128x1xi32>
    %6 = arith.addi %5, %3 : vector<128x1xi32>
    %c128_i32_3 = arith.constant 128 : i32
    %7 = vector.broadcast %c128_i32_3 : i32 to vector<128x1xi32>
    %8 = arith.cmpi slt, %6, %7 : vector<128x1xi32>
    %9 = arith.extui %8 : vector<128x1xi1> to vector<128x1xi32>
    %10 = arith.sitofp %9 : vector<128x1xi32> to vector<128x1xf32>
    %cst = arith.constant dense<0xFF800000> : vector<128xf32>
    %11 = vector.multi_reduction <maximumf>, %0, %cst [1] : vector<128x10xf32> to vector<128xf32>
    %12 = vector.shape_cast %11 : vector<128xf32> to vector<128x1xf32>
    %13 = vector.broadcast %12 : vector<128x1xf32> to vector<128x10xf32>
    %14 = arith.subf %0, %13 : vector<128x10xf32>
    %15 = math.exp %14 : vector<128x10xf32>
    %cst_4 = arith.constant dense<0.000000e+00> : vector<128xf32>
    %16 = vector.multi_reduction <add>, %15, %cst_4 [1] : vector<128x10xf32> to vector<128xf32>
    %17 = vector.shape_cast %16 : vector<128xf32> to vector<128x1xf32>
    %18 = math.log %17 : vector<128x1xf32>
    %19 = arith.addf %12, %18 : vector<128x1xf32>
    %20 = vector.broadcast %1 : vector<128x1xi32> to vector<128x10xi32>
    %21 = arith.cmpi eq, %2, %20 : vector<128x10xi32>
    %22 = arith.extui %21 : vector<128x10xi1> to vector<128x10xi32>
    %23 = arith.sitofp %22 : vector<128x10xi32> to vector<128x10xf32>
    %24 = arith.mulf %0, %23 : vector<128x10xf32>
    %cst_5 = arith.constant dense<0.000000e+00> : vector<128xf32>
    %25 = vector.multi_reduction <add>, %24, %cst_5 [1] : vector<128x10xf32> to vector<128xf32>
    %26 = vector.shape_cast %25 : vector<128xf32> to vector<128x1xf32>
    %27 = arith.subf %19, %26 : vector<128x1xf32>
    %28 = arith.mulf %10, %27 : vector<128x1xf32>
    %29 = vector.broadcast %12 : vector<128x1xf32> to vector<128x10xf32>
    %30 = arith.cmpf oeq, %0, %29 : vector<128x10xf32>
    %c10_i32 = arith.constant 10 : i32
    %31 = vector.broadcast %c10_i32 : i32 to vector<128x10xi32>
    %32 = arith.select %30, %2, %31 : vector<128x10xi1>, vector<128x10xi32>
    %cst_6 = arith.constant dense<2147483647> : vector<128xi32>
    %33 = vector.multi_reduction <minsi>, %32, %cst_6 [1] : vector<128x10xi32> to vector<128xi32>
    %34 = vector.shape_cast %33 : vector<128xi32> to vector<128x1xi32>
    %35 = arith.cmpi eq, %34, %1 : vector<128x1xi32>
    %36 = arith.extui %35 : vector<128x1xi1> to vector<128x1xi32>
    %37 = arith.sitofp %36 : vector<128x1xi32> to vector<128x1xf32>
    %38 = arith.mulf %10, %37 : vector<128x1xf32>
    %39 = arith.subf %12, %19 : vector<128x1xf32>
    %40 = math.exp %39 : vector<128x1xf32>
    %cst_7 = arith.constant 1.000000e+00 : f32
    %41 = vector.broadcast %cst_7 : f32 to vector<128x1xf32>
    %42 = arith.subf %41, %40 : vector<128x1xf32>
    %43 = arith.mulf %38, %42 : vector<128x1xf32>
    %44 = arith.subf %10, %38 : vector<128x1xf32>
    %45 = arith.mulf %44, %40 : vector<128x1xf32>
    %cst_8 = arith.constant 2.500000e+00 : f32
    %46 = vector.broadcast %cst_8 : f32 to vector<128x1xf32>
    %47 = arith.mulf %40, %46 : vector<128x1xf32>
    %48 = math.exp %47 : vector<128x1xf32>
    %cst_9 = arith.constant -2.500000e+00 : f32
    %49 = vector.broadcast %cst_9 : f32 to vector<128x1xf32>
    %50 = arith.mulf %40, %49 : vector<128x1xf32>
    %51 = math.exp %50 : vector<128x1xf32>
    %52 = tpu.iota {dimensions = array<i32: 1>} : vector<128x8xi32>
    %c0_i32 = arith.constant 0 : i32
    %53 = vector.broadcast %c0_i32 : i32 to vector<128x8xi32>
    %54 = arith.cmpi eq, %52, %53 : vector<128x8xi32>
    %c1_i32 = arith.constant 1 : i32
    %55 = vector.broadcast %c1_i32 : i32 to vector<128x8xi32>
    %56 = arith.cmpi eq, %52, %55 : vector<128x8xi32>
    %c2_i32 = arith.constant 2 : i32
    %57 = vector.broadcast %c2_i32 : i32 to vector<128x8xi32>
    %58 = arith.cmpi eq, %52, %57 : vector<128x8xi32>
    %c3_i32 = arith.constant 3 : i32
    %59 = vector.broadcast %c3_i32 : i32 to vector<128x8xi32>
    %60 = arith.cmpi eq, %52, %59 : vector<128x8xi32>
    %c4_i32 = arith.constant 4 : i32
    %61 = vector.broadcast %c4_i32 : i32 to vector<128x8xi32>
    %62 = arith.cmpi eq, %52, %61 : vector<128x8xi32>
    %c5_i32 = arith.constant 5 : i32
    %63 = vector.broadcast %c5_i32 : i32 to vector<128x8xi32>
    %64 = arith.cmpi eq, %52, %63 : vector<128x8xi32>
    %cst_10 = arith.constant 0.000000e+00 : f32
    %65 = vector.shape_cast %38 : vector<128x1xf32> to vector<128x1xf32>
    %66 = vector.broadcast %65 : vector<128x1xf32> to vector<128x8xf32>
    %67 = vector.broadcast %cst_10 : f32 to vector<128x8xf32>
    %68 = arith.select %64, %66, %67 : vector<128x8xi1>, vector<128x8xf32>
    %69 = vector.shape_cast %28 : vector<128x1xf32> to vector<128x1xf32>
    %70 = vector.broadcast %69 : vector<128x1xf32> to vector<128x8xf32>
    %71 = arith.select %62, %70, %68 : vector<128x8xi1>, vector<128x8xf32>
    %72 = vector.shape_cast %45 : vector<128x1xf32> to vector<128x1xf32>
    %73 = vector.broadcast %72 : vector<128x1xf32> to vector<128x8xf32>
    %74 = arith.select %60, %73, %71 : vector<128x8xi1>, vector<128x8xf32>
    %75 = vector.shape_cast %43 : vector<128x1xf32> to vector<128x1xf32>
    %76 = vector.broadcast %75 : vector<128x1xf32> to vector<128x8xf32>
    %77 = arith.select %58, %76, %74 : vector<128x8xi1>, vector<128x8xf32>
    %78 = vector.shape_cast %51 : vector<128x1xf32> to vector<128x1xf32>
    %79 = vector.broadcast %78 : vector<128x1xf32> to vector<128x8xf32>
    %80 = arith.select %56, %79, %77 : vector<128x8xi1>, vector<128x8xf32>
    %81 = vector.shape_cast %48 : vector<128x1xf32> to vector<128x1xf32>
    %82 = vector.broadcast %81 : vector<128x1xf32> to vector<128x8xf32>
    %83 = arith.select %54, %82, %80 : vector<128x8xi1>, vector<128x8xf32>
    %c0_11 = arith.constant 0 : index
    %c0_12 = arith.constant 0 : index
    %84 = vector.load %arg3[%c0_11, %c0_12] : memref<128x8xf32, #tpu.memory_space<vmem>>, vector<128x8xf32>
    tpu.vector_store %arg3[%c0_11, %c0_12], %83 {strides = array<i32>} : memref<128x8xf32, #tpu.memory_space<vmem>>, vector<128x8xf32>,
    return
  }
  func.func @transform_0(%arg0: i32) -> (i32, i32) {
    %c0_i32 = arith.constant 0 : i32
    %c0_i32_0 = arith.constant 0 : i32
    return %arg0, %c0_i32 : i32, i32
  }
  func.func @transform_1(%arg0: i32) -> (i32, i32) {
    %c0_i32 = arith.constant 0 : i32
    %c0_i32_0 = arith.constant 0 : i32
    return %arg0, %c0_i32 : i32, i32
  }
  func.func @transform_2(%arg0: i32) -> (i32, i32) {
    %c0_i32 = arith.constant 0 : i32
    %c0_i32_0 = arith.constant 0 : i32
    return %arg0, %c0_i32 : i32, i32
  }
}

</mosaic_0001>

<llo_original>
// kernel: tpu_custom_call.1
$region0: #{tpu_custom_call.1}
  #allocation0 [shape = 'u32[]', space=smem, size = 0x4, offset = 0x4, fixed_abs, tag = 'smem constant byte address 0x4 - core index']
  #allocation1 [shape = 'u32[144,128]{1,0:T(1,128)}', space=vmem, size = 0x12000, scoped, tag = 'internal scratch']
  %s0 = inlined_call_operand.vmem [shape: f32[128,10], index: 0, kind: input, shape index: {}]
  %s1 = inlined_call_operand.vmem [shape: s32[128,1], index: 1, kind: input, shape index: {}]
  %s2 = inlined_call_operand.vmem [shape: f32[128,8], index: 2, kind: output, shape index: {}]
  %s3 = sld [smem:[#allocation0]]
  $region18: #{tpu_custom_call.1} parent=0
    _
  %s5 = ssub.s32 1, %s3
  %s6 = scalar_select 0, %s5, %s3
  // Predicated region
  $region2: #{tpu_custom_call.1} parent=0 // pred_check
    _
  $region3: #{tpu_custom_call.1} parent=0 // pred_check_branch
    %8 = sbr.rel (0) target = $region5
  $region4: #{tpu_custom_call.1} parent=0 // pred_region
    _
  $region5: #{tpu_custom_call.1} parent=0 // pred_fallthru
    _
  // Predicated region
  $region6: #{tpu_custom_call.1} parent=0 // pred_check
    _
  $region7: #{tpu_custom_call.1} parent=0 // pred_check_branch
    %10 = sbr.rel (0) target = $region9
  $region8: #{tpu_custom_call.1} parent=0 // pred_region
    _
  $region9: #{tpu_custom_call.1} parent=0 // pred_fallthru
    _
  %v11 = vld [vmem:[%s0] sm:$0xff]
  %v12 = vld [vmem:[%s0 + $0x8] sm:$0xff]
  %v13 = vld [vmem:[%s0 + $0x10] sm:$0xff]
  %v14 = vld [vmem:[%s0 + $0x18] sm:$0xff]
  %v15 = vld [vmem:[%s0 + $0x20] sm:$0xff]
  %v16 = vld [vmem:[%s0 + $0x28] sm:$0xff]
  %v17 = vld [vmem:[%s0 + $0x30] sm:$0xff]
  %v18 = vld [vmem:[%s0 + $0x38] sm:$0xff]
  %v19 = vld [vmem:[%s0 + $0x40] sm:$0xff]
  %v20 = vld [vmem:[%s0 + $0x48] sm:$0xff]
  %v21 = vld [vmem:[%s0 + $0x50] sm:$0xff]
  %v22 = vld [vmem:[%s0 + $0x58] sm:$0xff]
  %v23 = vld [vmem:[%s0 + $0x60] sm:$0xff]
  %v24 = vld [vmem:[%s0 + $0x68] sm:$0xff]
  %v25 = vld [vmem:[%s0 + $0x70] sm:$0xff]
  %v26 = vld [vmem:[%s0 + $0x78] sm:$0xff]
  %v27 = vld [vmem:[%s1] sm:$0xff]
  %v28 = vld [vmem:[%s1 + $0x8] sm:$0xff]
  %v29 = vld [vmem:[%s1 + $0x10] sm:$0xff]
  %v30 = vld [vmem:[%s1 + $0x18] sm:$0xff]
  %v31 = vld [vmem:[%s1 + $0x20] sm:$0xff]
  %v32 = vld [vmem:[%s1 + $0x28] sm:$0xff]
  %v33 = vld [vmem:[%s1 + $0x30] sm:$0xff]
  %v34 = vld [vmem:[%s1 + $0x38] sm:$0xff]
  %v35 = vld [vmem:[%s1 + $0x40] sm:$0xff]
  %v36 = vld [vmem:[%s1 + $0x48] sm:$0xff]
  %v37 = vld [vmem:[%s1 + $0x50] sm:$0xff]
  %v38 = vld [vmem:[%s1 + $0x58] sm:$0xff]
  %v39 = vld [vmem:[%s1 + $0x60] sm:$0xff]
  %v40 = vld [vmem:[%s1 + $0x68] sm:$0xff]
  %v41 = vld [vmem:[%s1 + $0x70] sm:$0xff]
  %v42 = vld [vmem:[%s1 + $0x78] sm:$0xff]
  %v43 = vlaneseq
  %v44 = vand.u32 %v43, 127
  %v45 = vlaneseq
  %v46 = vshrl.u32 %v45, 7
  %v47 = vadd.s32 %v46, 8
  %v48 = vadd.s32 %v46, 16
  %v49 = vadd.s32 %v46, 24
  %v50 = vadd.s32 %v46, 32
  %v51 = vadd.s32 %v46, 40
  %v52 = vadd.s32 %v46, 48
  %v53 = vadd.s32 %v46, 56
  %v54 = vadd.s32 %v46, 64
  %v55 = vadd.s32 %v46, 72
  %v56 = vadd.s32 %v46, 80
  %v57 = vadd.s32 %v46, 88
  %v58 = vadd.s32 %v46, 96
  %v59 = vadd.s32 %v46, 104
  %v60 = vadd.s32 %v46, 112
  %v61 = vadd.s32 %v46, 120
  %s62 = smul.u32 0, 128
  %v63 = vstv %s62
  %v64 = vadd.s32 %v63, %v46
  %v65 = vadd.s32 %v63, %v47
  %v66 = vadd.s32 %v63, %v48
  %v67 = vadd.s32 %v63, %v49
  %v68 = vadd.s32 %v63, %v50
  %v69 = vadd.s32 %v63, %v51
  %v70 = vadd.s32 %v63, %v52
  %v71 = vadd.s32 %v63, %v53
  %v72 = vadd.s32 %v63, %v54
  %v73 = vadd.s32 %v63, %v55
  %v74 = vadd.s32 %v63, %v56
  %v75 = vadd.s32 %v63, %v57
  %v76 = vadd.s32 %v63, %v58
  %v77 = vadd.s32 %v63, %v59
  %v78 = vadd.s32 %v63, %v60
  %v79 = vadd.s32 %v63, %v61
  %vm80 = vcmp.lt.s32.totalorder %v64, 128
  %vm81 = vcmp.lt.s32.totalorder %v65, 128
  %vm82 = vcmp.lt.s32.totalorder %v66, 128
  %vm83 = vcmp.lt.s32.totalorder %v67, 128
  %vm84 = vcmp.lt.s32.totalorder %v68, 128
  %vm85 = vcmp.lt.s32.totalorder %v69, 128
  %vm86 = vcmp.lt.s32.totalorder %v70, 128
  %vm87 = vcmp.lt.s32.totalorder %v71, 128
  %vm88 = vcmp.lt.s32.totalorder %v72, 128
  %vm89 = vcmp.lt.s32.totalorder %v73, 128
  %vm90 = vcmp.lt.s32.totalorder %v74, 128
  %vm91 = vcmp.lt.s32.totalorder %v75, 128
  %vm92 = vcmp.lt.s32.totalorder %v76, 128
  %vm93 = vcmp.lt.s32.totalorder %v77, 128
  %vm94 = vcmp.lt.s32.totalorder %v78, 128
  %vm95 = vcmp.lt.s32.totalorder %v79, 128
  %v96 = vsel %vm80, 1, 0
  %v97 = vsel %vm81, 1, 0
  %v98 = vsel %vm82, 1, 0
  %v99 = vsel %vm83, 1, 0
  %v100 = vsel %vm84, 1, 0
  %v101 = vsel %vm85, 1, 0
  %v102 = vsel %vm86, 1, 0
  %v103 = vsel %vm87, 1, 0
  %v104 = vsel %vm88, 1, 0
  %v105 = vsel %vm89, 1, 0
  %v106 = vsel %vm90, 1, 0
  %v107 = vsel %vm91, 1, 0
  %v108 = vsel %vm92, 1, 0
  %v109 = vsel %vm93, 1, 0
  %v110 = vsel %vm94, 1, 0
  %v111 = vsel %vm95, 1, 0
  %v112 = vcvt.s32.f32 %v96
  %v113 = vcvt.s32.f32 %v97
  %v114 = vcvt.s32.f32 %v98
  %v115 = vcvt.s32.f32 %v99
  %v116 = vcvt.s32.f32 %v100
  %v117 = vcvt.s32.f32 %v101
  %v118 = vcvt.s32.f32 %v102
  %v119 = vcvt.s32.f32 %v103
  %v120 = vcvt.s32.f32 %v104
  %v121 = vcvt.s32.f32 %v105
  %v122 = vcvt.s32.f32 %v106
  %v123 = vcvt.s32.f32 %v107
  %v124 = vcvt.s32.f32 %v108
  %v125 = vcvt.s32.f32 %v109
  %v126 = vcvt.s32.f32 %v110
  %v127 = vcvt.s32.f32 %v111
  %vm128 = vcmask 80896
  %v129 = vsel %vm128, %v11, -inf
  %130 = vmax.xlane.f32.xlu0 %v129
  %v131 = vpop.xlane.xlu0 %130
  %v132 = vsel %vm128, %v12, -inf
  %133 = vmax.xlane.f32.xlu0 %v132
  %v134 = vpop.xlane.xlu0 %133
  %v135 = vsel %vm128, %v13, -inf
  %136 = vmax.xlane.f32.xlu0 %v135
  %v137 = vpop.xlane.xlu0 %136
  %v138 = vsel %vm128, %v14, -inf
  %139 = vmax.xlane.f32.xlu0 %v138
  %v140 = vpop.xlane.xlu0 %139
  %v141 = vsel %vm128, %v15, -inf
  %142 = vmax.xlane.f32.xlu0 %v141
  %v143 = vpop.xlane.xlu0 %142
  %v144 = vsel %vm128, %v16, -inf
  %145 = vmax.xlane.f32.xlu0 %v144
  %v146 = vpop.xlane.xlu0 %145
  %v147 = vsel %vm128, %v17, -inf
  %148 = vmax.xlane.f32.xlu0 %v147
  %v149 = vpop.xlane.xlu0 %148
  %v150 = vsel %vm128, %v18, -inf
  %151 = vmax.xlane.f32.xlu0 %v150
  %v152 = vpop.xlane.xlu0 %151
  %v153 = vsel %vm128, %v19, -inf
  %154 = vmax.xlane.f32.xlu0 %v153
  %v155 = vpop.xlane.xlu0 %154
  %v156 = vsel %vm128, %v20, -inf
  %157 = vmax.xlane.f32.xlu0 %v156
  %v158 = vpop.xlane.xlu0 %157
  %v159 = vsel %vm128, %v21, -inf
  %160 = vmax.xlane.f32.xlu0 %v159
  %v161 = vpop.xlane.xlu0 %160
  %v162 = vsel %vm128, %v22, -inf
  %163 = vmax.xlane.f32.xlu0 %v162
  %v164 = vpop.xlane.xlu0 %163
  %v165 = vsel %vm128, %v23, -inf
  %166 = vmax.xlane.f32.xlu0 %v165
  %v167 = vpop.xlane.xlu0 %166
  %v168 = vsel %vm128, %v24, -inf
  %169 = vmax.xlane.f32.xlu0 %v168
  %v170 = vpop.xlane.xlu0 %169
  %v171 = vsel %vm128, %v25, -inf
  %172 = vmax.xlane.f32.xlu0 %v171
  %v173 = vpop.xlane.xlu0 %172
  %v174 = vsel %vm128, %v26, -inf
  %175 = vmax.xlane.f32.xlu0 %v174
  %v176 = vpop.xlane.xlu0 %175
  %v177 = vsub.f32 %v11, %v131
  %v178 = vsub.f32 %v12, %v134
  %v179 = vsub.f32 %v13, %v137
  %v180 = vsub.f32 %v14, %v140
  %v181 = vsub.f32 %v15, %v143
  %v182 = vsub.f32 %v16, %v146
  %v183 = vsub.f32 %v17, %v149
  %v184 = vsub.f32 %v18, %v152
  %v185 = vsub.f32 %v19, %v155
  %v186 = vsub.f32 %v20, %v158
  %v187 = vsub.f32 %v21, %v161
  %v188 = vsub.f32 %v22, %v164
  %v189 = vsub.f32 %v23, %v167
  %v190 = vsub.f32 %v24, %v170
  %v191 = vsub.f32 %v25, %v173
  %v192 = vsub.f32 %v26, %v176
  %v193 = vmul.f32 %v177, 1.442695
  %v194 = vpow.pop %v193
  %v195 = vmul.f32 %v178, 1.442695
  %v196 = vpow.pop %v195
  %v197 = vmul.f32 %v179, 1.442695
  %v198 = vpow.pop %v197
  %v199 = vmul.f32 %v180, 1.442695
  %v200 = vpow.pop %v199
  %v201 = vmul.f32 %v181, 1.442695
  %v202 = vpow.pop %v201
  %v203 = vmul.f32 %v182, 1.442695
  %v204 = vpow.pop %v203
  %v205 = vmul.f32 %v183, 1.442695
  %v206 = vpow.pop %v205
  %v207 = vmul.f32 %v184, 1.442695
  %v208 = vpow.pop %v207
  %v209 = vmul.f32 %v185, 1.442695
  %v210 = vpow.pop %v209
  %v211 = vmul.f32 %v186, 1.442695
  %v212 = vpow.pop %v211
  %v213 = vmul.f32 %v187, 1.442695
  %v214 = vpow.pop %v213
  %v215 = vmul.f32 %v188, 1.442695
  %v216 = vpow.pop %v215
  %v217 = vmul.f32 %v189, 1.442695
  %v218 = vpow.pop %v217
  %v219 = vmul.f32 %v190, 1.442695
  %v220 = vpow.pop %v219
  %v221 = vmul.f32 %v191, 1.442695
  %v222 = vpow.pop %v221
  %v223 = vmul.f32 %v192, 1.442695
  %v224 = vpow.pop %v223
  %v225 = vsel %vm128, %v194, 0.0
  %226 = vadd.xlane.f32.xlu0 %v225
  %v227 = vpop.xlane.xlu0 %226
  %v228 = vsel %vm128, %v196, 0.0
  %229 = vadd.xlane.f32.xlu0 %v228
  %v230 = vpop.xlane.xlu0 %229
  %v231 = vsel %vm128, %v198, 0.0
  %232 = vadd.xlane.f32.xlu0 %v231
  %v233 = vpop.xlane.xlu0 %232
  %v234 = vsel %vm128, %v200, 0.0
  %235 = vadd.xlane.f32.xlu0 %v234
  %v236 = vpop.xlane.xlu0 %235
  %v237 = vsel %vm128, %v202, 0.0
  %238 = vadd.xlane.f32.xlu0 %v237
  %v239 = vpop.xlane.xlu0 %238
  %v240 = vsel %vm128, %v204, 0.0
  %241 = vadd.xlane.f32.xlu0 %v240
  %v242 = vpop.xlane.xlu0 %241
  %v243 = vsel %vm128, %v206, 0.0
  %244 = vadd.xlane.f32.xlu0 %v243
  %v245 = vpop.xlane.xlu0 %244
  %v246 = vsel %vm128, %v208, 0.0
  %247 = vadd.xlane.f32.xlu0 %v246
  %v248 = vpop.xlane.xlu0 %247
  %v249 = vsel %vm128, %v210, 0.0
  %250 = vadd.xlane.f32.xlu0 %v249
  %v251 = vpop.xlane.xlu0 %250
  %v252 = vsel %vm128, %v212, 0.0
  %253 = vadd.xlane.f32.xlu0 %v252
  %v254 = vpop.xlane.xlu0 %253
  %v255 = vsel %vm128, %v214, 0.0
  %256 = vadd.xlane.f32.xlu0 %v255
  %v257 = vpop.xlane.xlu0 %256
  %v258 = vsel %vm128, %v216, 0.0
  %259 = vadd.xlane.f32.xlu0 %v258
  %v260 = vpop.xlane.xlu0 %259
  %v261 = vsel %vm128, %v218, 0.0
  %262 = vadd.xlane.f32.xlu0 %v261
  %v263 = vpop.xlane.xlu0 %262
  %v264 = vsel %vm128, %v220, 0.0
  %265 = vadd.xlane.f32.xlu0 %v264
  %v266 = vpop.xlane.xlu0 %265
  %v267 = vsel %vm128, %v222, 0.0
  %268 = vadd.xlane.f32.xlu0 %v267
  %v269 = vpop.xlane.xlu0 %268
  %v270 = vsel %vm128, %v224, 0.0
  %271 = vadd.xlane.f32.xlu0 %v270
  %v272 = vpop.xlane.xlu0 %271
  %v273 = vlog2.pop %v227
  %v274 = vmul.f32 %v273, 0.6931472
  %v275 = vlog2.pop %v230
  %v276 = vmul.f32 %v275, 0.6931472
  %v277 = vlog2.pop %v233
  %v278 = vmul.f32 %v277, 0.6931472
  %v279 = vlog2.pop %v236
  %v280 = vmul.f32 %v279, 0.6931472
  %v281 = vlog2.pop %v239
  %v282 = vmul.f32 %v281, 0.6931472
  %v283 = vlog2.pop %v242
  %v284 = vmul.f32 %v283, 0.6931472
  %v285 = vlog2.pop %v245
  %v286 = vmul.f32 %v285, 0.6931472
  %v287 = vlog2.pop %v248
  %v288 = vmul.f32 %v287, 0.6931472
  %v289 = vlog2.pop %v251
  %v290 = vmul.f32 %v289, 0.6931472
  %v291 = vlog2.pop %v254
  %v292 = vmul.f32 %v291, 0.6931472
  %v293 = vlog2.pop %v257
  %v294 = vmul.f32 %v293, 0.6931472
  %v295 = vlog2.pop %v260
  %v296 = vmul.f32 %v295, 0.6931472
  %v297 = vlog2.pop %v263
  %v298 = vmul.f32 %v297, 0.6931472
  %v299 = vlog2.pop %v266
  %v300 = vmul.f32 %v299, 0.6931472
  %v301 = vlog2.pop %v269
  %v302 = vmul.f32 %v301, 0.6931472
  %v303 = vlog2.pop %v272
  %v304 = vmul.f32 %v303, 0.6931472
  %v305 = vadd.f32 %v131, %v274
  %v306 = vadd.f32 %v134, %v276
  %v307 = vadd.f32 %v137, %v278
  %v308 = vadd.f32 %v140, %v280
  %v309 = vadd.f32 %v143, %v282
  %v310 = vadd.f32 %v146, %v284
  %v311 = vadd.f32 %v149, %v286
  %v312 = vadd.f32 %v152, %v288
  %v313 = vadd.f32 %v155, %v290
  %v314 = vadd.f32 %v158, %v292
  %v315 = vadd.f32 %v161, %v294
  %v316 = vadd.f32 %v164, %v296
  %v317 = vadd.f32 %v167, %v298
  %v318 = vadd.f32 %v170, %v300
  %v319 = vadd.f32 %v173, %v302
  %v320 = vadd.f32 %v176, %v304
  %321 = vset.pattern.permute.xlu0 0
  %322 = vperm.xlu0 %321, %v27
  %v323 = vpop.permute.xlu0 %322
  %324 = vset.pattern.permute.xlu0 0
  %325 = vperm.xlu0 %324, %v28
  %v326 = vpop.permute.xlu0 %325
  %327 = vset.pattern.permute.xlu0 0
  %328 = vperm.xlu0 %327, %v29
  %v329 = vpop.permute.xlu0 %328
  %330 = vset.pattern.permute.xlu0 0
  %331 = vperm.xlu0 %330, %v30
  %v332 = vpop.permute.xlu0 %331
  %333 = vset.pattern.permute.xlu0 0
  %334 = vperm.xlu0 %333, %v31
  %v335 = vpop.permute.xlu0 %334
  %336 = vset.pattern.permute.xlu0 0
  %337 = vperm.xlu0 %336, %v32
  %v338 = vpop.permute.xlu0 %337
  %339 = vset.pattern.permute.xlu0 0
  %340 = vperm.xlu0 %339, %v33
  %v341 = vpop.permute.xlu0 %340
  %342 = vset.pattern.permute.xlu0 0
  %343 = vperm.xlu0 %342, %v34
  %v344 = vpop.permute.xlu0 %343
  %345 = vset.pattern.permute.xlu0 0
  %346 = vperm.xlu0 %345, %v35
  %v347 = vpop.permute.xlu0 %346
  %348 = vset.pattern.permute.xlu0 0
  %349 = vperm.xlu0 %348, %v36
  %v350 = vpop.permute.xlu0 %349
  %351 = vset.pattern.permute.xlu0 0
  %352 = vperm.xlu0 %351, %v37
  %v353 = vpop.permute.xlu0 %352
  %354 = vset.pattern.permute.xlu0 0
  %355 = vperm.xlu0 %354, %v38
  %v356 = vpop.permute.xlu0 %355
  %357 = vset.pattern.permute.xlu0 0
  %358 = vperm.xlu0 %357, %v39
  %v359 = vpop.permute.xlu0 %358
  %360 = vset.pattern.permute.xlu0 0
  %361 = vperm.xlu0 %360, %v40
  %v362 = vpop.permute.xlu0 %361
  %363 = vset.pattern.permute.xlu0 0
  %364 = vperm.xlu0 %363, %v41
  %v365 = vpop.permute.xlu0 %364
  %366 = vset.pattern.permute.xlu0 0
  %367 = vperm.xlu0 %366, %v42
  %v368 = vpop.permute.xlu0 %367
  %vm369 = vcmp.eq.s32.totalorder %v44, %v323
  %vm370 = vcmp.eq.s32.totalorder %v44, %v326
  %vm371 = vcmp.eq.s32.totalorder %v44, %v329
  %vm372 = vcmp.eq.s32.totalorder %v44, %v332
  %vm373 = vcmp.eq.s32.totalorder %v44, %v335
  %vm374 = vcmp.eq.s32.totalorder %v44, %v338
  %vm375 = vcmp.eq.s32.totalorder %v44, %v341
  %vm376 = vcmp.eq.s32.totalorder %v44, %v344
  %vm377 = vcmp.eq.s32.totalorder %v44, %v347
  %vm378 = vcmp.eq.s32.totalorder %v44, %v350
  %vm379 = vcmp.eq.s32.totalorder %v44, %v353
  %vm380 = vcmp.eq.s32.totalorder %v44, %v356
  %vm381 = vcmp.eq.s32.totalorder %v44, %v359
  %vm382 = vcmp.eq.s32.totalorder %v44, %v362
  %vm383 = vcmp.eq.s32.totalorder %v44, %v365
  %vm384 = vcmp.eq.s32.totalorder %v44, %v368
  %v385 = vsel %vm369, 1, 0
  %v386 = vsel %vm370, 1, 0
  %v387 = vsel %vm371, 1, 0
  %v388 = vsel %vm372, 1, 0
  %v389 = vsel %vm373, 1, 0
  %v390 = vsel %vm374, 1, 0
  %v391 = vsel %vm375, 1, 0
  %v392 = vsel %vm376, 1, 0
  %v393 = vsel %vm377, 1, 0
  %v394 = vsel %vm378, 1, 0
  %v395 = vsel %vm379, 1, 0
  %v396 = vsel %vm380, 1, 0
  %v397 = vsel %vm381, 1, 0
  %v398 = vsel %vm382, 1, 0
  %v399 = vsel %vm383, 1, 0
  %v400 = vsel %vm384, 1, 0
  %v401 = vcvt.s32.f32 %v385
  %v402 = vcvt.s32.f32 %v386
  %v403 = vcvt.s32.f32 %v387
  %v404 = vcvt.s32.f32 %v388
  %v405 = vcvt.s32.f32 %v389
  %v406 = vcvt.s32.f32 %v390
  %v407 = vcvt.s32.f32 %v391
  %v408 = vcvt.s32.f32 %v392
  %v409 = vcvt.s32.f32 %v393
  %v410 = vcvt.s32.f32 %v394
  %v411 = vcvt.s32.f32 %v395
  %v412 = vcvt.s32.f32 %v396
  %v413 = vcvt.s32.f32 %v397
  %v414 = vcvt.s32.f32 %v398
  %v415 = vcvt.s32.f32 %v399
  %v416 = vcvt.s32.f32 %v400
  %v417 = vmul.f32 %v11, %v401
  %v418 = vmul.f32 %v12, %v402
  %v419 = vmul.f32 %v13, %v403
  %v420 = vmul.f32 %v14, %v404
  %v421 = vmul.f32 %v15, %v405
  %v422 = vmul.f32 %v16, %v406
  %v423 = vmul.f32 %v17, %v407
  %v424 = vmul.f32 %v18, %v408
  %v425 = vmul.f32 %v19, %v409
  %v426 = vmul.f32 %v20, %v410
  %v427 = vmul.f32 %v21, %v411
  %v428 = vmul.f32 %v22, %v412
  %v429 = vmul.f32 %v23, %v413
  %v430 = vmul.f32 %v24, %v414
  %v431 = vmul.f32 %v25, %v415
  %v432 = vmul.f32 %v26, %v416
  %v433 = vsel %vm128, %v417, 0.0
  %434 = vadd.xlane.f32.xlu0 %v433
  %v435 = vpop.xlane.xlu0 %434
  %v436 = vsel %vm128, %v418, 0.0
  %437 = vadd.xlane.f32.xlu0 %v436
  %v438 = vpop.xlane.xlu0 %437
  %v439 = vsel %vm128, %v419, 0.0
  %440 = vadd.xlane.f32.xlu0 %v439
  %v441 = vpop.xlane.xlu0 %440
  %v442 = vsel %vm128, %v420, 0.0
  %443 = vadd.xlane.f32.xlu0 %v442
  %v444 = vpop.xlane.xlu0 %443
  %v445 = vsel %vm128, %v421, 0.0
  %446 = vadd.xlane.f32.xlu0 %v445
  %v447 = vpop.xlane.xlu0 %446
  %v448 = vsel %vm128, %v422, 0.0
  %449 = vadd.xlane.f32.xlu0 %v448
  %v450 = vpop.xlane.xlu0 %449
  %v451 = vsel %vm128, %v423, 0.0
  %452 = vadd.xlane.f32.xlu0 %v451
  %v453 = vpop.xlane.xlu0 %452
  %v454 = vsel %vm128, %v424, 0.0
  %455 = vadd.xlane.f32.xlu0 %v454
  %v456 = vpop.xlane.xlu0 %455
  %v457 = vsel %vm128, %v425, 0.0
  %458 = vadd.xlane.f32.xlu0 %v457
  %v459 = vpop.xlane.xlu0 %458
  %v460 = vsel %vm128, %v426, 0.0
  %461 = vadd.xlane.f32.xlu0 %v460
  %v462 = vpop.xlane.xlu0 %461
  %v463 = vsel %vm128, %v427, 0.0
  %464 = vadd.xlane.f32.xlu0 %v463
  %v465 = vpop.xlane.xlu0 %464
  %v466 = vsel %vm128, %v428, 0.0
  %467 = vadd.xlane.f32.xlu0 %v466
  %v468 = vpop.xlane.xlu0 %467
  %v469 = vsel %vm128, %v429, 0.0
  %470 = vadd.xlane.f32.xlu0 %v469
  %v471 = vpop.xlane.xlu0 %470
  %v472 = vsel %vm128, %v430, 0.0
  %473 = vadd.xlane.f32.xlu0 %v472
  %v474 = vpop.xlane.xlu0 %473
  %v475 = vsel %vm128, %v431, 0.0
  %476 = vadd.xlane.f32.xlu0 %v475
  %v477 = vpop.xlane.xlu0 %476
  %v478 = vsel %vm128, %v432, 0.0
  %479 = vadd.xlane.f32.xlu0 %v478
  %v480 = vpop.xlane.xlu0 %479
  %v481 = vsub.f32 %v305, %v435
  %v482 = vsub.f32 %v306, %v438
  %v483 = vsub.f32 %v307, %v441
  %v484 = vsub.f32 %v308, %v444
  %v485 = vsub.f32 %v309, %v447
  %v486 = vsub.f32 %v310, %v450
  %v487 = vsub.f32 %v311, %v453
  %v488 = vsub.f32 %v312, %v456
  %v489 = vsub.f32 %v313, %v459
  %v490 = vsub.f32 %v314, %v462
  %v491 = vsub.f32 %v315, %v465
  %v492 = vsub.f32 %v316, %v468
  %v493 = vsub.f32 %v317, %v471
  %v494 = vsub.f32 %v318, %v474
  %v495 = vsub.f32 %v319, %v477
  %v496 = vsub.f32 %v320, %v480
  %v497 = vmul.f32 %v112, %v481
  %v498 = vmul.f32 %v113, %v482
  %v499 = vmul.f32 %v114, %v483
  %v500 = vmul.f32 %v115, %v484
  %v501 = vmul.f32 %v116, %v485
  %v502 = vmul.f32 %v117, %v486
  %v503 = vmul.f32 %v118, %v487
  %v504 = vmul.f32 %v119, %v488
  %v505 = vmul.f32 %v120, %v489
  %v506 = vmul.f32 %v121, %v490
  %v507 = vmul.f32 %v122, %v491
  %v508 = vmul.f32 %v123, %v492
  %v509 = vmul.f32 %v124, %v493
  %v510 = vmul.f32 %v125, %v494
  %v511 = vmul.f32 %v126, %v495
  %v512 = vmul.f32 %v127, %v496
  %vm513 = vcmp.eq.f32.partialorder %v11, %v131
  %vm514 = vcmp.eq.f32.partialorder %v12, %v134
  %vm515 = vcmp.eq.f32.partialorder %v13, %v137
  %vm516 = vcmp.eq.f32.partialorder %v14, %v140
  %vm517 = vcmp.eq.f32.partialorder %v15, %v143
  %vm518 = vcmp.eq.f32.partialorder %v16, %v146
  %vm519 = vcmp.eq.f32.partialorder %v17, %v149
  %vm520 = vcmp.eq.f32.partialorder %v18, %v152
  %vm521 = vcmp.eq.f32.partialorder %v19, %v155
  %vm522 = vcmp.eq.f32.partialorder %v20, %v158
  %vm523 = vcmp.eq.f32.partialorder %v21, %v161
  %vm524 = vcmp.eq.f32.partialorder %v22, %v164
  %vm525 = vcmp.eq.f32.partialorder %v23, %v167
  %vm526 = vcmp.eq.f32.partialorder %v24, %v170
  %vm527 = vcmp.eq.f32.partialorder %v25, %v173
  %vm528 = vcmp.eq.f32.partialorder %v26, %v176
  %v529 = vsel %vm513, %v44, 10
  %v530 = vsel %vm514, %v44, 10
  %v531 = vsel %vm515, %v44, 10
  %v532 = vsel %vm516, %v44, 10
  %v533 = vsel %vm517, %v44, 10
  %v534 = vsel %vm518, %v44, 10
  %v535 = vsel %vm519, %v44, 10
  %v536 = vsel %vm520, %v44, 10
  %v537 = vsel %vm521, %v44, 10
  %v538 = vsel %vm522, %v44, 10
  %v539 = vsel %vm523, %v44, 10
  %v540 = vsel %vm524, %v44, 10
  %v541 = vsel %vm525, %v44, 10
  %v542 = vsel %vm526, %v44, 10
  %v543 = vsel %vm527, %v44, 10
  %v544 = vsel %vm528, %v44, 10
  %v545 = vsel %vm128, %v529, 2147483647
  %v546 = vand.u32 %v545, 65535
  %v547 = vshra.s32 %v545, 16
  %v548 = vcvt.s32.f32 %v546
  %v549 = vcvt.s32.f32 %v547
  %550 = vmin.xlane.f32.xlu0 %v549
  %v551 = vpop.xlane.xlu0 %550
  %vm552 = vcmp.eq.f32.partialorder %v549, %v551
  %v553 = vsel %vm552, %v548, inf
  %554 = vmin.xlane.f32.xlu0 %v553
  %v555 = vpop.xlane.xlu0 %554
  %v556 = vcvt.f32.s32 %v555
  %v557 = vcvt.f32.s32 %v551
  %v558 = vshll.u32 %v557, 16
  %v559 = vadd.s32 %v558, %v556
  %v560 = vsel %vm128, %v530, 2147483647
  %v561 = vand.u32 %v560, 65535
  %v562 = vshra.s32 %v560, 16
  %v563 = vcvt.s32.f32 %v561
  %v564 = vcvt.s32.f32 %v562
  %565 = vmin.xlane.f32.xlu0 %v564
  %v566 = vpop.xlane.xlu0 %565
  %vm567 = vcmp.eq.f32.partialorder %v564, %v566
  %v568 = vsel %vm567, %v563, inf
  %569 = vmin.xlane.f32.xlu0 %v568
  %v570 = vpop.xlane.xlu0 %569
  %v571 = vcvt.f32.s32 %v570
  %v572 = vcvt.f32.s32 %v566
  %v573 = vshll.u32 %v572, 16
  %v574 = vadd.s32 %v573, %v571
  %v575 = vsel %vm128, %v531, 2147483647
  %v576 = vand.u32 %v575, 65535
  %v577 = vshra.s32 %v575, 16
  %v578 = vcvt.s32.f32 %v576
  %v579 = vcvt.s32.f32 %v577
  %580 = vmin.xlane.f32.xlu0 %v579
  %v581 = vpop.xlane.xlu0 %580
  %vm582 = vcmp.eq.f32.partialorder %v579, %v581
  %v583 = vsel %vm582, %v578, inf
  %584 = vmin.xlane.f32.xlu0 %v583
  %v585 = vpop.xlane.xlu0 %584
  %v586 = vcvt.f32.s32 %v585
  %v587 = vcvt.f32.s32 %v581
  %v588 = vshll.u32 %v587, 16
  %v589 = vadd.s32 %v588, %v586
  %v590 = vsel %vm128, %v532, 2147483647
  %v591 = vand.u32 %v590, 65535
  %v592 = vshra.s32 %v590, 16
  %v593 = vcvt.s32.f32 %v591
  %v594 = vcvt.s32.f32 %v592
  %595 = vmin.xlane.f32.xlu0 %v594
  %v596 = vpop.xlane.xlu0 %595
  %vm597 = vcmp.eq.f32.partialorder %v594, %v596
  %v598 = vsel %vm597, %v593, inf
  %599 = vmin.xlane.f32.xlu0 %v598
  %v600 = vpop.xlane.xlu0 %599
  %v601 = vcvt.f32.s32 %v600
  %v602 = vcvt.f32.s32 %v596
  %v603 = vshll.u32 %v602, 16
  %v604 = vadd.s32 %v603, %v601
  %v605 = vsel %vm128, %v533, 2147483647
  %v606 = vand.u32 %v605, 65535
  %v607 = vshra.s32 %v605, 16
  %v608 = vcvt.s32.f32 %v606
  %v609 = vcvt.s32.f32 %v607
  %610 = vmin.xlane.f32.xlu0 %v609
  %v611 = vpop.xlane.xlu0 %610
  %vm612 = vcmp.eq.f32.partialorder %v609, %v611
  %v613 = vsel %vm612, %v608, inf
  %614 = vmin.xlane.f32.xlu0 %v613
  %v615 = vpop.xlane.xlu0 %614
  %v616 = vcvt.f32.s32 %v615
  %v617 = vcvt.f32.s32 %v611
  %v618 = vshll.u32 %v617, 16
  %v619 = vadd.s32 %v618, %v616
  %v620 = vsel %vm128, %v534, 2147483647
  %v621 = vand.u32 %v620, 65535
  %v622 = vshra.s32 %v620, 16
  %v623 = vcvt.s32.f32 %v621
  %v624 = vcvt.s32.f32 %v622
  %625 = vmin.xlane.f32.xlu0 %v624
  %v626 = vpop.xlane.xlu0 %625
  %vm627 = vcmp.eq.f32.partialorder %v624, %v626
  %v628 = vsel %vm627, %v623, inf
  %629 = vmin.xlane.f32.xlu0 %v628
  %v630 = vpop.xlane.xlu0 %629
  %v631 = vcvt.f32.s32 %v630
  %v632 = vcvt.f32.s32 %v626
  %v633 = vshll.u32 %v632, 16
  %v634 = vadd.s32 %v633, %v631
  %v635 = vsel %vm128, %v535, 2147483647
  %v636 = vand.u32 %v635, 65535
  %v637 = vshra.s32 %v635, 16
  %v638 = vcvt.s32.f32 %v636
  %v639 = vcvt.s32.f32 %v637
  %640 = vmin.xlane.f32.xlu0 %v639
  %v641 = vpop.xlane.xlu0 %640
  %vm642 = vcmp.eq.f32.partialorder %v639, %v641
  %v643 = vsel %vm642, %v638, inf
  %644 = vmin.xlane.f32.xlu0 %v643
  %v645 = vpop.xlane.xlu0 %644
  %v646 = vcvt.f32.s32 %v645
  %v647 = vcvt.f32.s32 %v641
  %v648 = vshll.u32 %v647, 16
  %v649 = vadd.s32 %v648, %v646
  %v650 = vsel %vm128, %v536, 2147483647
  %v651 = vand.u32 %v650, 65535
  %v652 = vshra.s32 %v650, 16
  %v653 = vcvt.s32.f32 %v651
  %v654 = vcvt.s32.f32 %v652
  %655 = vmin.xlane.f32.xlu0 %v654
  %v656 = vpop.xlane.xlu0 %655
  %vm657 = vcmp.eq.f32.partialorder %v654, %v656
  %v658 = vsel %vm657, %v653, inf
  %659 = vmin.xlane.f32.xlu0 %v658
  %v660 = vpop.xlane.xlu0 %659
  %v661 = vcvt.f32.s32 %v660
  %v662 = vcvt.f32.s32 %v656
  %v663 = vshll.u32 %v662, 16
  %v664 = vadd.s32 %v663, %v661
  %v665 = vsel %vm128, %v537, 2147483647
  %v666 = vand.u32 %v665, 65535
  %v667 = vshra.s32 %v665, 16
  %v668 = vcvt.s32.f32 %v666
  %v669 = vcvt.s32.f32 %v667
  %670 = vmin.xlane.f32.xlu0 %v669
  %v671 = vpop.xlane.xlu0 %670
  %vm672 = vcmp.eq.f32.partialorder %v669, %v671
  %v673 = vsel %vm672, %v668, inf
  %674 = vmin.xlane.f32.xlu0 %v673
  %v675 = vpop.xlane.xlu0 %674
  %v676 = vcvt.f32.s32 %v675
  %v677 = vcvt.f32.s32 %v671
  %v678 = vshll.u32 %v677, 16
  %v679 = vadd.s32 %v678, %v676
  %v680 = vsel %vm128, %v538, 2147483647
  %v681 = vand.u32 %v680, 65535
  %v682 = vshra.s32 %v680, 16
  %v683 = vcvt.s32.f32 %v681
  %v684 = vcvt.s32.f32 %v682
  %685 = vmin.xlane.f32.xlu0 %v684
  %v686 = vpop.xlane.xlu0 %685
  %vm687 = vcmp.eq.f32.partialorder %v684, %v686
  %v688 = vsel %vm687, %v683, inf
  %689 = vmin.xlane.f32.xlu0 %v688
  %v690 = vpop.xlane.xlu0 %689
  %v691 = vcvt.f32.s32 %v690
  %v692 = vcvt.f32.s32 %v686
  %v693 = vshll.u32 %v692, 16
  %v694 = vadd.s32 %v693, %v691
  %v695 = vsel %vm128, %v539, 2147483647
  %v696 = vand.u32 %v695, 65535
  %v697 = vshra.s32 %v695, 16
  %v698 = vcvt.s32.f32 %v696
  %v699 = vcvt.s32.f32 %v697
  %700 = vmin.xlane.f32.xlu0 %v699
  %v701 = vpop.xlane.xlu0 %700
  %vm702 = vcmp.eq.f32.partialorder %v699, %v701
  %v703 = vsel %vm702, %v698, inf
  %704 = vmin.xlane.f32.xlu0 %v703
  %v705 = vpop.xlane.xlu0 %704
  %v706 = vcvt.f32.s32 %v705
  %v707 = vcvt.f32.s32 %v701
  %v708 = vshll.u32 %v707, 16
  %v709 = vadd.s32 %v708, %v706
  %v710 = vsel %vm128, %v540, 2147483647
  %v711 = vand.u32 %v710, 65535
  %v712 = vshra.s32 %v710, 16
  %v713 = vcvt.s32.f32 %v711
  %v714 = vcvt.s32.f32 %v712
  %715 = vmin.xlane.f32.xlu0 %v714
  %v716 = vpop.xlane.xlu0 %715
  %vm717 = vcmp.eq.f32.partialorder %v714, %v716
  %v718 = vsel %vm717, %v713, inf
  %719 = vmin.xlane.f32.xlu0 %v718
  %v720 = vpop.xlane.xlu0 %719
  %v721 = vcvt.f32.s32 %v720
  %v722 = vcvt.f32.s32 %v716
  %v723 = vshll.u32 %v722, 16
  %v724 = vadd.s32 %v723, %v721
  %v725 = vsel %vm128, %v541, 2147483647
  %v726 = vand.u32 %v725, 65535
  %v727 = vshra.s32 %v725, 16
  %v728 = vcvt.s32.f32 %v726
  %v729 = vcvt.s32.f32 %v727
  %730 = vmin.xlane.f32.xlu0 %v729
  %v731 = vpop.xlane.xlu0 %730
  %vm732 = vcmp.eq.f32.partialorder %v729, %v731
  %v733 = vsel %vm732, %v728, inf
  %734 = vmin.xlane.f32.xlu0 %v733
  %v735 = vpop.xlane.xlu0 %734
  %v736 = vcvt.f32.s32 %v735
  %v737 = vcvt.f32.s32 %v731
  %v738 = vshll.u32 %v737, 16
  %v739 = vadd.s32 %v738, %v736
  %v740 = vsel %vm128, %v542, 2147483647
  %v741 = vand.u32 %v740, 65535
  %v742 = vshra.s32 %v740, 16
  %v743 = vcvt.s32.f32 %v741
  %v744 = vcvt.s32.f32 %v742
  %745 = vmin.xlane.f32.xlu0 %v744
  %v746 = vpop.xlane.xlu0 %745
  %vm747 = vcmp.eq.f32.partialorder %v744, %v746
  %v748 = vsel %vm747, %v743, inf
  %749 = vmin.xlane.f32.xlu0 %v748
  %v750 = vpop.xlane.xlu0 %749
  %v751 = vcvt.f32.s32 %v750
  %v752 = vcvt.f32.s32 %v746
  %v753 = vshll.u32 %v752, 16
  %v754 = vadd.s32 %v753, %v751
  %v755 = vsel %vm128, %v543, 2147483647
  %v756 = vand.u32 %v755, 65535
  %v757 = vshra.s32 %v755, 16
  %v758 = vcvt.s32.f32 %v756
  %v759 = vcvt.s32.f32 %v757
  %760 = vmin.xlane.f32.xlu0 %v759
  %v761 = vpop.xlane.xlu0 %760
  %vm762 = vcmp.eq.f32.partialorder %v759, %v761
  %v763 = vsel %vm762, %v758, inf
  %764 = vmin.xlane.f32.xlu0 %v763
  %v765 = vpop.xlane.xlu0 %764
  %v766 = vcvt.f32.s32 %v765
  %v767 = vcvt.f32.s32 %v761
  %v768 = vshll.u32 %v767, 16
  %v769 = vadd.s32 %v768, %v766
  %v770 = vsel %vm128, %v544, 2147483647
  %v771 = vand.u32 %v770, 65535
  %v772 = vshra.s32 %v770, 16
  %v773 = vcvt.s32.f32 %v771
  %v774 = vcvt.s32.f32 %v772
  %775 = vmin.xlane.f32.xlu0 %v774
  %v776 = vpop.xlane.xlu0 %775
  %vm777 = vcmp.eq.f32.partialorder %v774, %v776
  %v778 = vsel %vm777, %v773, inf
  %779 = vmin.xlane.f32.xlu0 %v778
  %v780 = vpop.xlane.xlu0 %779
  %v781 = vcvt.f32.s32 %v780
  %v782 = vcvt.f32.s32 %v776
  %v783 = vshll.u32 %v782, 16
  %v784 = vadd.s32 %v783, %v781
  %vm785 = vcmp.eq.s32.totalorder %v559, %v27
  %vm786 = vcmp.eq.s32.totalorder %v574, %v28
  %vm787 = vcmp.eq.s32.totalorder %v589, %v29
  %vm788 = vcmp.eq.s32.totalorder %v604, %v30
  %vm789 = vcmp.eq.s32.totalorder %v619, %v31
  %vm790 = vcmp.eq.s32.totalorder %v634, %v32
  %vm791 = vcmp.eq.s32.totalorder %v649, %v33
  %vm792 = vcmp.eq.s32.totalorder %v664, %v34
  %vm793 = vcmp.eq.s32.totalorder %v679, %v35
  %vm794 = vcmp.eq.s32.totalorder %v694, %v36
  %vm795 = vcmp.eq.s32.totalorder %v709, %v37
  %vm796 = vcmp.eq.s32.totalorder %v724, %v38
  %vm797 = vcmp.eq.s32.totalorder %v739, %v39
  %vm798 = vcmp.eq.s32.totalorder %v754, %v40
  %vm799 = vcmp.eq.s32.totalorder %v769, %v41
  %vm800 = vcmp.eq.s32.totalorder %v784, %v42
  %v801 = vsel %vm785, 1, 0
  %v802 = vsel %vm786, 1, 0
  %v803 = vsel %vm787, 1, 0
  %v804 = vsel %vm788, 1, 0
  %v805 = vsel %vm789, 1, 0
  %v806 = vsel %vm790, 1, 0
  %v807 = vsel %vm791, 1, 0
  %v808 = vsel %vm792, 1, 0
  %v809 = vsel %vm793, 1, 0
  %v810 = vsel %vm794, 1, 0
  %v811 = vsel %vm795, 1, 0
  %v812 = vsel %vm796, 1, 0
  %v813 = vsel %vm797, 1, 0
  %v814 = vsel %vm798, 1, 0
  %v815 = vsel %vm799, 1, 0
  %v816 = vsel %vm800, 1, 0
  %v817 = vcvt.s32.f32 %v801
  %v818 = vcvt.s32.f32 %v802
  %v819 = vcvt.s32.f32 %v803
  %v820 = vcvt.s32.f32 %v804
  %v821 = vcvt.s32.f32 %v805
  %v822 = vcvt.s32.f32 %v806
  %v823 = vcvt.s32.f32 %v807
  %v824 = vcvt.s32.f32 %v808
  %v825 = vcvt.s32.f32 %v809
  %v826 = vcvt.s32.f32 %v810
  %v827 = vcvt.s32.f32 %v811
  %v828 = vcvt.s32.f32 %v812
  %v829 = vcvt.s32.f32 %v813
  %v830 = vcvt.s32.f32 %v814
  %v831 = vcvt.s32.f32 %v815
  %v832 = vcvt.s32.f32 %v816
  %v833 = vmul.f32 %v112, %v817
  %v834 = vmul.f32 %v113, %v818
  %v835 = vmul.f32 %v114, %v819
  %v836 = vmul.f32 %v115, %v820
  %v837 = vmul.f32 %v116, %v821
  %v838 = vmul.f32 %v117, %v822
  %v839 = vmul.f32 %v118, %v823
  %v840 = vmul.f32 %v119, %v824
  %v841 = vmul.f32 %v120, %v825
  %v842 = vmul.f32 %v121, %v826
  %v843 = vmul.f32 %v122, %v827
  %v844 = vmul.f32 %v123, %v828
  %v845 = vmul.f32 %v124, %v829
  %v846 = vmul.f32 %v125, %v830
  %v847 = vmul.f32 %v126, %v831
  %v848 = vmul.f32 %v127, %v832
  %v849 = vsub.f32 %v131, %v305
  %v850 = vsub.f32 %v134, %v306
  %v851 = vsub.f32 %v137, %v307
  %v852 = vsub.f32 %v140, %v308
  %v853 = vsub.f32 %v143, %v309
  %v854 = vsub.f32 %v146, %v310
  %v855 = vsub.f32 %v149, %v311
  %v856 = vsub.f32 %v152, %v312
  %v857 = vsub.f32 %v155, %v313
  %v858 = vsub.f32 %v158, %v314
  %v859 = vsub.f32 %v161, %v315
  %v860 = vsub.f32 %v164, %v316
  %v861 = vsub.f32 %v167, %v317
  %v862 = vsub.f32 %v170, %v318
  %v863 = vsub.f32 %v173, %v319
  %v864 = vsub.f32 %v176, %v320
  %v865 = vmul.f32 %v849, 1.442695
  %v866 = vpow.pop %v865
  %v867 = vmul.f32 %v850, 1.442695
  %v868 = vpow.pop %v867
  %v869 = vmul.f32 %v851, 1.442695
  %v870 = vpow.pop %v869
  %v871 = vmul.f32 %v852, 1.442695
  %v872 = vpow.pop %v871
  %v873 = vmul.f32 %v853, 1.442695
  %v874 = vpow.pop %v873
  %v875 = vmul.f32 %v854, 1.442695
  %v876 = vpow.pop %v875
  %v877 = vmul.f32 %v855, 1.442695
  %v878 = vpow.pop %v877
  %v879 = vmul.f32 %v856, 1.442695
  %v880 = vpow.pop %v879
  %v881 = vmul.f32 %v857, 1.442695
  %v882 = vpow.pop %v881
  %v883 = vmul.f32 %v858, 1.442695
  %v884 = vpow.pop %v883
  %v885 = vmul.f32 %v859, 1.442695
  %v886 = vpow.pop %v885
  %v887 = vmul.f32 %v860, 1.442695
  %v888 = vpow.pop %v887
  %v889 = vmul.f32 %v861, 1.442695
  %v890 = vpow.pop %v889
  %v891 = vmul.f32 %v862, 1.442695
  %v892 = vpow.pop %v891
  %v893 = vmul.f32 %v863, 1.442695
  %v894 = vpow.pop %v893
  %v895 = vmul.f32 %v864, 1.442695
  %v896 = vpow.pop %v895
  %v897 = vsub.f32 1.0, %v866
  %v898 = vsub.f32 1.0, %v868
  %v899 = vsub.f32 1.0, %v870
  %v900 = vsub.f32 1.0, %v872
  %v901 = vsub.f32 1.0, %v874
  %v902 = vsub.f32 1.0, %v876
  %v903 = vsub.f32 1.0, %v878
  %v904 = vsub.f32 1.0, %v880
  %v905 = vsub.f32 1.0, %v882
  %v906 = vsub.f32 1.0, %v884
  %v907 = vsub.f32 1.0, %v886
  %v908 = vsub.f32 1.0, %v888
  %v909 = vsub.f32 1.0, %v890
  %v910 = vsub.f32 1.0, %v892
  %v911 = vsub.f32 1.0, %v894
  %v912 = vsub.f32 1.0, %v896
  %v913 = vmul.f32 %v833, %v897
  %v914 = vmul.f32 %v834, %v898
  %v915 = vmul.f32 %v835, %v899
  %v916 = vmul.f32 %v836, %v900
  %v917 = vmul.f32 %v837, %v901
  %v918 = vmul.f32 %v838, %v902
  %v919 = vmul.f32 %v839, %v903
  %v920 = vmul.f32 %v840, %v904
  %v921 = vmul.f32 %v841, %v905
  %v922 = vmul.f32 %v842, %v906
  %v923 = vmul.f32 %v843, %v907
  %v924 = vmul.f32 %v844, %v908
  %v925 = vmul.f32 %v845, %v909
  %v926 = vmul.f32 %v846, %v910
  %v927 = vmul.f32 %v847, %v911
  %v928 = vmul.f32 %v848, %v912
  %v929 = vsub.f32 %v112, %v833
  %v930 = vsub.f32 %v113, %v834
  %v931 = vsub.f32 %v114, %v835
  %v932 = vsub.f32 %v115, %v836
  %v933 = vsub.f32 %v116, %v837
  %v934 = vsub.f32 %v117, %v838
  %v935 = vsub.f32 %v118, %v839
  %v936 = vsub.f32 %v119, %v840
  %v937 = vsub.f32 %v120, %v841
  %v938 = vsub.f32 %v121, %v842
  %v939 = vsub.f32 %v122, %v843
  %v940 = vsub.f32 %v123, %v844
  %v941 = vsub.f32 %v124, %v845
  %v942 = vsub.f32 %v125, %v846
  %v943 = vsub.f32 %v126, %v847
  %v944 = vsub.f32 %v127, %v848
  %v945 = vmul.f32 %v929, %v866
  %v946 = vmul.f32 %v930, %v868
  %v947 = vmul.f32 %v931, %v870
  %v948 = vmul.f32 %v932, %v872
  %v949 = vmul.f32 %v933, %v874
  %v950 = vmul.f32 %v934, %v876
  %v951 = vmul.f32 %v935, %v878
  %v952 = vmul.f32 %v936, %v880
  %v953 = vmul.f32 %v937, %v882
  %v954 = vmul.f32 %v938, %v884
  %v955 = vmul.f32 %v939, %v886
  %v956 = vmul.f32 %v940, %v888
  %v957 = vmul.f32 %v941, %v890
  %v958 = vmul.f32 %v942, %v892
  %v959 = vmul.f32 %v943, %v894
  %v960 = vmul.f32 %v944, %v896
  %v961 = vmul.f32 %v866, 2.5
  %v962 = vmul.f32 %v868, 2.5
  %v963 = vmul.f32 %v870, 2.5
  %v964 = vmul.f32 %v872, 2.5
  %v965 = vmul.f32 %v874, 2.5
  %v966 = vmul.f32 %v876, 2.5
  %v967 = vmul.f32 %v878, 2.5
  %v968 = vmul.f32 %v880, 2.5
  %v969 = vmul.f32 %v882, 2.5
  %v970 = vmul.f32 %v884, 2.5
  %v971 = vmul.f32 %v886, 2.5
  %v972 = vmul.f32 %v888, 2.5
  %v973 = vmul.f32 %v890, 2.5
  %v974 = vmul.f32 %v892, 2.5
  %v975 = vmul.f32 %v894, 2.5
  %v976 = vmul.f32 %v896, 2.5
  %v977 = vmul.f32 %v961, 1.442695
  %v978 = vpow.pop %v977
  %v979 = vmul.f32 %v962, 1.442695
  %v980 = vpow.pop %v979
  %v981 = vmul.f32 %v963, 1.442695
  %v982 = vpow.pop %v981
  %v983 = vmul.f32 %v964, 1.442695
  %v984 = vpow.pop %v983
  %v985 = vmul.f32 %v965, 1.442695
  %v986 = vpow.pop %v985
  %v987 = vmul.f32 %v966, 1.442695
  %v988 = vpow.pop %v987
  %v989 = vmul.f32 %v967, 1.442695
  %v990 = vpow.pop %v989
  %v991 = vmul.f32 %v968, 1.442695
  %v992 = vpow.pop %v991
  %v993 = vmul.f32 %v969, 1.442695
  %v994 = vpow.pop %v993
  %v995 = vmul.f32 %v970, 1.442695
  %v996 = vpow.pop %v995
  %v997 = vmul.f32 %v971, 1.442695
  %v998 = vpow.pop %v997
  %v999 = vmul.f32 %v972, 1.442695
  %v1000 = vpow.pop %v999
  %v1001 = vmul.f32 %v973, 1.442695
  %v1002 = vpow.pop %v1001
  %v1003 = vmul.f32 %v974, 1.442695
  %v1004 = vpow.pop %v1003
  %v1005 = vmul.f32 %v975, 1.442695
  %v1006 = vpow.pop %v1005
  %v1007 = vmul.f32 %v976, 1.442695
  %v1008 = vpow.pop %v1007
  %v1009 = vmul.f32 %v866, -2.5
  %v1010 = vmul.f32 %v868, -2.5
  %v1011 = vmul.f32 %v870, -2.5
  %v1012 = vmul.f32 %v872, -2.5
  %v1013 = vmul.f32 %v874, -2.5
  %v1014 = vmul.f32 %v876, -2.5
  %v1015 = vmul.f32 %v878, -2.5
  %v1016 = vmul.f32 %v880, -2.5
  %v1017 = vmul.f32 %v882, -2.5
  %v1018 = vmul.f32 %v884, -2.5
  %v1019 = vmul.f32 %v886, -2.5
  %v1020 = vmul.f32 %v888, -2.5
  %v1021 = vmul.f32 %v890, -2.5
  %v1022 = vmul.f32 %v892, -2.5
  %v1023 = vmul.f32 %v894, -2.5
  %v1024 = vmul.f32 %v896, -2.5
  %v1025 = vmul.f32 %v1009, 1.442695
  %v1026 = vpow.pop %v1025
  %v1027 = vmul.f32 %v1010, 1.442695
  %v1028 = vpow.pop %v1027
  %v1029 = vmul.f32 %v1011, 1.442695
  %v1030 = vpow.pop %v1029
  %v1031 = vmul.f32 %v1012, 1.442695
  %v1032 = vpow.pop %v1031
  %v1033 = vmul.f32 %v1013, 1.442695
  %v1034 = vpow.pop %v1033
  %v1035 = vmul.f32 %v1014, 1.442695
  %v1036 = vpow.pop %v1035
  %v1037 = vmul.f32 %v1015, 1.442695
  %v1038 = vpow.pop %v1037
  %v1039 = vmul.f32 %v1016, 1.442695
  %v1040 = vpow.pop %v1039
  %v1041 = vmul.f32 %v1017, 1.442695
  %v1042 = vpow.pop %v1041
  %v1043 = vmul.f32 %v1018, 1.442695
  %v1044 = vpow.pop %v1043
  %v1045 = vmul.f32 %v1019, 1.442695
  %v1046 = vpow.pop %v1045
  %v1047 = vmul.f32 %v1020, 1.442695
  %v1048 = vpow.pop %v1047
  %v1049 = vmul.f32 %v1021, 1.442695
  %v1050 = vpow.pop %v1049
  %v1051 = vmul.f32 %v1022, 1.442695
  %v1052 = vpow.pop %v1051
  %v1053 = vmul.f32 %v1023, 1.442695
  %v1054 = vpow.pop %v1053
  %v1055 = vmul.f32 %v1024, 1.442695
  %v1056 = vpow.pop %v1055
  %vm1057 = vcmp.eq.s32.totalorder %v44, 0
  %vm1058 = vcmp.eq.s32.totalorder %v44, 1
  %vm1059 = vcmp.eq.s32.totalorder %v44, 2
  %vm1060 = vcmp.eq.s32.totalorder %v44, 3
  %vm1061 = vcmp.eq.s32.totalorder %v44, 4
  %vm1062 = vcmp.eq.s32.totalorder %v44, 5
  %1064 = vset.pattern.permute.xlu0 0
  %1065 = vperm.xlu0 %1064, %v833
  %v1066 = vpop.permute.xlu0 %1065
  %1069 = vset.pattern.permute.xlu0 0
  %1070 = vperm.xlu0 %1069, %v834
  %v1071 = vpop.permute.xlu0 %1070
  %1074 = vset.pattern.permute.xlu0 0
  %1075 = vperm.xlu0 %1074, %v835
  %v1076 = vpop.permute.xlu0 %1075
  %1079 = vset.pattern.permute.xlu0 0
  %1080 = vperm.xlu0 %1079, %v836
  %v1081 = vpop.permute.xlu0 %1080
  %1084 = vset.pattern.permute.xlu0 0
  %1085 = vperm.xlu0 %1084, %v837
  %v1086 = vpop.permute.xlu0 %1085
  %1089 = vset.pattern.permute.xlu0 0
  %1090 = vperm.xlu0 %1089, %v838
  %v1091 = vpop.permute.xlu0 %1090
  %1094 = vset.pattern.permute.xlu0 0
  %1095 = vperm.xlu0 %1094, %v839
  %v1096 = vpop.permute.xlu0 %1095
  %1099 = vset.pattern.permute.xlu0 0
  %1100 = vperm.xlu0 %1099, %v840
  %v1101 = vpop.permute.xlu0 %1100
  %1104 = vset.pattern.permute.xlu0 0
  %1105 = vperm.xlu0 %1104, %v841
  %v1106 = vpop.permute.xlu0 %1105
  %1109 = vset.pattern.permute.xlu0 0
  %1110 = vperm.xlu0 %1109, %v842
  %v1111 = vpop.permute.xlu0 %1110
  %1114 = vset.pattern.permute.xlu0 0
  %1115 = vperm.xlu0 %1114, %v843
  %v1116 = vpop.permute.xlu0 %1115
  %1119 = vset.pattern.permute.xlu0 0
  %1120 = vperm.xlu0 %1119, %v844
  %v1121 = vpop.permute.xlu0 %1120
  %1124 = vset.pattern.permute.xlu0 0
  %1125 = vperm.xlu0 %1124, %v845
  %v1126 = vpop.permute.xlu0 %1125
  %1129 = vset.pattern.permute.xlu0 0
  %1130 = vperm.xlu0 %1129, %v846
  %v1131 = vpop.permute.xlu0 %1130
  %1134 = vset.pattern.permute.xlu0 0
  %1135 = vperm.xlu0 %1134, %v847
  %v1136 = vpop.permute.xlu0 %1135
  %1139 = vset.pattern.permute.xlu0 0
  %1140 = vperm.xlu0 %1139, %v848
  %v1141 = vpop.permute.xlu0 %1140
  %v1143 = vsel %vm1062, %v1066, 0.0
  %v1144 = vsel %vm1062, %v1071, 0.0
  %v1145 = vsel %vm1062, %v1076, 0.0
  %v1146 = vsel %vm1062, %v1081, 0.0
  %v1147 = vsel %vm1062, %v1086, 0.0
  %v1148 = vsel %vm1062, %v1091, 0.0
  %v1149 = vsel %vm1062, %v1096, 0.0
  %v1150 = vsel %vm1062, %v1101, 0.0
  %v1151 = vsel %vm1062, %v1106, 0.0
  %v1152 = vsel %vm1062, %v1111, 0.0
  %v1153 = vsel %vm1062, %v1116, 0.0
  %v1154 = vsel %vm1062, %v1121, 0.0
  %v1155 = vsel %vm1062, %v1126, 0.0
  %v1156 = vsel %vm1062, %v1131, 0.0
  %v1157 = vsel %vm1062, %v1136, 0.0
  %v1158 = vsel %vm1062, %v1141, 0.0
  %v1159 = vsel %vm1061, %v497, %v1143
  %v1160 = vsel %vm1061, %v498, %v1144
  %v1161 = vsel %vm1061, %v499, %v1145
  %v1162 = vsel %vm1061, %v500, %v1146
  %v1163 = vsel %vm1061, %v501, %v1147
  %v1164 = vsel %vm1061, %v502, %v1148
  %v1165 = vsel %vm1061, %v503, %v1149
  %v1166 = vsel %vm1061, %v504, %v1150
  %v1167 = vsel %vm1061, %v505, %v1151
  %v1168 = vsel %vm1061, %v506, %v1152
  %v1169 = vsel %vm1061, %v507, %v1153
  %v1170 = vsel %vm1061, %v508, %v1154
  %v1171 = vsel %vm1061, %v509, %v1155
  %v1172 = vsel %vm1061, %v510, %v1156
  %v1173 = vsel %vm1061, %v511, %v1157
  %v1174 = vsel %vm1061, %v512, %v1158
  %1176 = vset.pattern.permute.xlu0 0
  %1177 = vperm.xlu0 %1176, %v945
  %v1178 = vpop.permute.xlu0 %1177
  %1181 = vset.pattern.permute.xlu0 0
  %1182 = vperm.xlu0 %1181, %v946
  %v1183 = vpop.permute.xlu0 %1182
  %1186 = vset.pattern.permute.xlu0 0
  %1187 = vperm.xlu0 %1186, %v947
  %v1188 = vpop.permute.xlu0 %1187
  %1191 = vset.pattern.permute.xlu0 0
  %1192 = vperm.xlu0 %1191, %v948
  %v1193 = vpop.permute.xlu0 %1192
  %1196 = vset.pattern.permute.xlu0 0
  %1197 = vperm.xlu0 %1196, %v949
  %v1198 = vpop.permute.xlu0 %1197
  %1201 = vset.pattern.permute.xlu0 0
  %1202 = vperm.xlu0 %1201, %v950
  %v1203 = vpop.permute.xlu0 %1202
  %1206 = vset.pattern.permute.xlu0 0
  %1207 = vperm.xlu0 %1206, %v951
  %v1208 = vpop.permute.xlu0 %1207
  %1211 = vset.pattern.permute.xlu0 0
  %1212 = vperm.xlu0 %1211, %v952
  %v1213 = vpop.permute.xlu0 %1212
  %1216 = vset.pattern.permute.xlu0 0
  %1217 = vperm.xlu0 %1216, %v953
  %v1218 = vpop.permute.xlu0 %1217
  %1221 = vset.pattern.permute.xlu0 0
  %1222 = vperm.xlu0 %1221, %v954
  %v1223 = vpop.permute.xlu0 %1222
  %1226 = vset.pattern.permute.xlu0 0
  %1227 = vperm.xlu0 %1226, %v955
  %v1228 = vpop.permute.xlu0 %1227
  %1231 = vset.pattern.permute.xlu0 0
  %1232 = vperm.xlu0 %1231, %v956
  %v1233 = vpop.permute.xlu0 %1232
  %1236 = vset.pattern.permute.xlu0 0
  %1237 = vperm.xlu0 %1236, %v957
  %v1238 = vpop.permute.xlu0 %1237
  %1241 = vset.pattern.permute.xlu0 0
  %1242 = vperm.xlu0 %1241, %v958
  %v1243 = vpop.permute.xlu0 %1242
  %1246 = vset.pattern.permute.xlu0 0
  %1247 = vperm.xlu0 %1246, %v959
  %v1248 = vpop.permute.xlu0 %1247
  %1251 = vset.pattern.permute.xlu0 0
  %1252 = vperm.xlu0 %1251, %v960
  %v1253 = vpop.permute.xlu0 %1252
  %v1255 = vsel %vm1060, %v1178, %v1159
  %v1256 = vsel %vm1060, %v1183, %v1160
  %v1257 = vsel %vm1060, %v1188, %v1161
  %v1258 = vsel %vm1060, %v1193, %v1162
  %v1259 = vsel %vm1060, %v1198, %v1163
  %v1260 = vsel %vm1060, %v1203, %v1164
  %v1261 = vsel %vm1060, %v1208, %v1165
  %v1262 = vsel %vm1060, %v1213, %v1166
  %v1263 = vsel %vm1060, %v1218, %v1167
  %v1264 = vsel %vm1060, %v1223, %v1168
  %v1265 = vsel %vm1060, %v1228, %v1169
  %v1266 = vsel %vm1060, %v1233, %v1170
  %v1267 = vsel %vm1060, %v1238, %v1171
  %v1268 = vsel %vm1060, %v1243, %v1172
  %v1269 = vsel %vm1060, %v1248, %v1173
  %v1270 = vsel %vm1060, %v1253, %v1174
  %1272 = vset.pattern.permute.xlu0 0
  %1273 = vperm.xlu0 %1272, %v913
  %v1274 = vpop.permute.xlu0 %1273
  %1277 = vset.pattern.permute.xlu0 0
  %1278 = vperm.xlu0 %1277, %v914
  %v1279 = vpop.permute.xlu0 %1278
  %1282 = vset.pattern.permute.xlu0 0
  %1283 = vperm.xlu0 %1282, %v915
  %v1284 = vpop.permute.xlu0 %1283
  %1287 = vset.pattern.permute.xlu0 0
  %1288 = vperm.xlu0 %1287, %v916
  %v1289 = vpop.permute.xlu0 %1288
  %1292 = vset.pattern.permute.xlu0 0
  %1293 = vperm.xlu0 %1292, %v917
  %v1294 = vpop.permute.xlu0 %1293
  %1297 = vset.pattern.permute.xlu0 0
  %1298 = vperm.xlu0 %1297, %v918
  %v1299 = vpop.permute.xlu0 %1298
  %1302 = vset.pattern.permute.xlu0 0
  %1303 = vperm.xlu0 %1302, %v919
  %v1304 = vpop.permute.xlu0 %1303
  %1307 = vset.pattern.permute.xlu0 0
  %1308 = vperm.xlu0 %1307, %v920
  %v1309 = vpop.permute.xlu0 %1308
  %1312 = vset.pattern.permute.xlu0 0
  %1313 = vperm.xlu0 %1312, %v921
  %v1314 = vpop.permute.xlu0 %1313
  %1317 = vset.pattern.permute.xlu0 0
  %1318 = vperm.xlu0 %1317, %v922
  %v1319 = vpop.permute.xlu0 %1318
  %1322 = vset.pattern.permute.xlu0 0
  %1323 = vperm.xlu0 %1322, %v923
  %v1324 = vpop.permute.xlu0 %1323
  %1327 = vset.pattern.permute.xlu0 0
  %1328 = vperm.xlu0 %1327, %v924
  %v1329 = vpop.permute.xlu0 %1328
  %1332 = vset.pattern.permute.xlu0 0
  %1333 = vperm.xlu0 %1332, %v925
  %v1334 = vpop.permute.xlu0 %1333
  %1337 = vset.pattern.permute.xlu0 0
  %1338 = vperm.xlu0 %1337, %v926
  %v1339 = vpop.permute.xlu0 %1338
  %1342 = vset.pattern.permute.xlu0 0
  %1343 = vperm.xlu0 %1342, %v927
  %v1344 = vpop.permute.xlu0 %1343
  %1347 = vset.pattern.permute.xlu0 0
  %1348 = vperm.xlu0 %1347, %v928
  %v1349 = vpop.permute.xlu0 %1348
  %v1351 = vsel %vm1059, %v1274, %v1255
  %v1352 = vsel %vm1059, %v1279, %v1256
  %v1353 = vsel %vm1059, %v1284, %v1257
  %v1354 = vsel %vm1059, %v1289, %v1258
  %v1355 = vsel %vm1059, %v1294, %v1259
  %v1356 = vsel %vm1059, %v1299, %v1260
  %v1357 = vsel %vm1059, %v1304, %v1261
  %v1358 = vsel %vm1059, %v1309, %v1262
  %v1359 = vsel %vm1059, %v1314, %v1263
  %v1360 = vsel %vm1059, %v1319, %v1264
  %v1361 = vsel %vm1059, %v1324, %v1265
  %v1362 = vsel %vm1059, %v1329, %v1266
  %v1363 = vsel %vm1059, %v1334, %v1267
  %v1364 = vsel %vm1059, %v1339, %v1268
  %v1365 = vsel %vm1059, %v1344, %v1269
  %v1366 = vsel %vm1059, %v1349, %v1270
  %v1367 = vsel %vm1058, %v1026, %v1351
  %v1368 = vsel %vm1058, %v1028, %v1352
  %v1369 = vsel %vm1058, %v1030, %v1353
  %v1370 = vsel %vm1058, %v1032, %v1354
  %v1371 = vsel %vm1058, %v1034, %v1355
  %v1372 = vsel %vm1058, %v1036, %v1356
  %v1373 = vsel %vm1058, %v1038, %v1357
  %v1374 = vsel %vm1058, %v1040, %v1358
  %v1375 = vsel %vm1058, %v1042, %v1359
  %v1376 = vsel %vm1058, %v1044, %v1360
  %v1377 = vsel %vm1058, %v1046, %v1361
  %v1378 = vsel %vm1058, %v1048, %v1362
  %v1379 = vsel %vm1058, %v1050, %v1363
  %v1380 = vsel %vm1058, %v1052, %v1364
  %v1381 = vsel %vm1058, %v1054, %v1365
  %v1382 = vsel %vm1058, %v1056, %v1366
  %v1383 = vsel %vm1057, %v978, %v1367
  %v1384 = vsel %vm1057, %v980, %v1368
  %v1385 = vsel %vm1057, %v982, %v1369
  %v1386 = vsel %vm1057, %v984, %v1370
  %v1387 = vsel %vm1057, %v986, %v1371
  %v1388 = vsel %vm1057, %v988, %v1372
  %v1389 = vsel %vm1057, %v990, %v1373
  %v1390 = vsel %vm1057, %v992, %v1374
  %v1391 = vsel %vm1057, %v994, %v1375
  %v1392 = vsel %vm1057, %v996, %v1376
  %v1393 = vsel %vm1057, %v998, %v1377
  %v1394 = vsel %vm1057, %v1000, %v1378
  %v1395 = vsel %vm1057, %v1002, %v1379
  %v1396 = vsel %vm1057, %v1004, %v1380
  %v1397 = vsel %vm1057, %v1006, %v1381
  %v1398 = vsel %vm1057, %v1008, %v1382
  %vm1399 = vcmask 64512
  %1400 = vst.msk [vmem:[%s2] sm:$0xff] %vm1399, %v1383
  %1401 = vst.msk [vmem:[%s2 + $0x8] sm:$0xff] %vm1399, %v1384
  %1402 = vst.msk [vmem:[%s2 + $0x10] sm:$0xff] %vm1399, %v1385
  %1403 = vst.msk [vmem:[%s2 + $0x18] sm:$0xff] %vm1399, %v1386
  %1404 = vst.msk [vmem:[%s2 + $0x20] sm:$0xff] %vm1399, %v1387
  %1405 = vst.msk [vmem:[%s2 + $0x28] sm:$0xff] %vm1399, %v1388
  %1406 = vst.msk [vmem:[%s2 + $0x30] sm:$0xff] %vm1399, %v1389
  %1407 = vst.msk [vmem:[%s2 + $0x38] sm:$0xff] %vm1399, %v1390
  %1408 = vst.msk [vmem:[%s2 + $0x40] sm:$0xff] %vm1399, %v1391
  %1409 = vst.msk [vmem:[%s2 + $0x48] sm:$0xff] %vm1399, %v1392
  %1410 = vst.msk [vmem:[%s2 + $0x50] sm:$0xff] %vm1399, %v1393
  %1411 = vst.msk [vmem:[%s2 + $0x58] sm:$0xff] %vm1399, %v1394
  %1412 = vst.msk [vmem:[%s2 + $0x60] sm:$0xff] %vm1399, %v1395
  %1413 = vst.msk [vmem:[%s2 + $0x68] sm:$0xff] %vm1399, %v1396
  %1414 = vst.msk [vmem:[%s2 + $0x70] sm:$0xff] %vm1399, %v1397
  %1415 = vst.msk [vmem:[%s2 + $0x78] sm:$0xff] %vm1399, %v1398
  // Predicated region
  $region10: #{tpu_custom_call.1} parent=0 // pred_check
    _
  $region11: #{tpu_custom_call.1} parent=0 // pred_check_branch
    %1417 = sbr.rel (0) target = $region13
  $region12: #{tpu_custom_call.1} parent=0 // pred_region
    _
  $region13: #{tpu_custom_call.1} parent=0 // pred_fallthru
    _
  // Predicated region
  $region14: #{tpu_custom_call.1} parent=0 // pred_check
    _
  $region15: #{tpu_custom_call.1} parent=0 // pred_check_branch
    %1419 = sbr.rel (0) target = $region17
  $region16: #{tpu_custom_call.1} parent=0 // pred_region
    _
  $region17: #{tpu_custom_call.1} parent=0 // pred_fallthru
    _

</llo_original>
